<compile_context>
chip_gen: v6e
topology: v6e:2x2x1
jax: 0.10.0
libtpu: 0.0.40
codegen_flags: <defaults>
</compile_context>

<pallas_src>
import functools

import jax
import jax.numpy as jnp
from jax.experimental import pallas as pl
from jax.experimental.pallas import tpu as pltpu

EPS = 1e-5  # nn.LayerNorm default


def _round_up(x, m):
    return ((x + m - 1) // m) * m


def _postnorm_kernel(x_ref, w_ref, b_ref, gamma_ref, beta_ref, o_ref, *, inv_d):
    # x_ref: (TM, D) bf16   w_ref: (D, D) bf16   b/gamma/beta: (1, D) f32
    # o_ref: (TM, D) bf16

    # fn(x) = x @ W + b  -- native bf16 operands on the MXU, f32 accumulation.
    y = jnp.dot(x_ref[...], w_ref[...], preferred_element_type=jnp.float32)
    y = y + b_ref[...]

    # LayerNorm over the last dim (f32 math), single fused pass of statistics:
    # the two reductions are independent so they can overlap on the XLUs.
    sum_y = jnp.sum(y, axis=-1, keepdims=True)
    sum_y2 = jnp.sum(y * y, axis=-1, keepdims=True)
    mean = sum_y * inv_d
    var = jnp.maximum(sum_y2 * inv_d - mean * mean, 0.0)
    y_hat = (y - mean) * jax.lax.rsqrt(var + EPS)

    o_ref[...] = (y_hat * gamma_ref[...] + beta_ref[...]).astype(o_ref.dtype)


def postnorm_linear(x, w, b, gamma, beta, *, tm=1024):
    """PostNorm(LayerNorm(D), Linear(D, D)) forward.

    x: (B, S, D); w: (D, D) laid out so y = x @ w; b/gamma/beta: (D,).
    x and w are streamed in bf16; accumulation and LayerNorm math are f32.
    """
    B, S, D = x.shape
    R = B * S

    # bf16 storage halves HBM traffic for the memory-bound path.
    x2 = x.reshape(R, D).astype(jnp.bfloat16)
    w2 = w.astype(jnp.bfloat16)

    # Row tile: multiple of 16 (bf16 packs 2 rows per sublane), no larger than
    # the row count, and >=2 tiles when rows allow so v7x megacore engages.
    tm = max(16, _round_up(min(tm, R), 16))
    if R >= 32 and pl.cdiv(R, tm) < 2:
        tm = max(16, _round_up(pl.cdiv(R, 2), 16))
    grid = (pl.cdiv(R, tm),)  # ragged last tile handled by Pallas; no jnp.pad

    # Per-channel vectors cast to f32 once, outside the kernel.
    b2 = b.reshape(1, D).astype(jnp.float32)
    g2 = gamma.reshape(1, D).astype(jnp.float32)
    be2 = beta.reshape(1, D).astype(jnp.float32)

    # Rough VMEM plan: double-buffered x/out tiles, single-buffered W/b/g/beta,
    # plus f32 intermediates of the tile; leave headroom, cap under v7x 64 MiB.
    est = (2 * tm * D * 2          # x (bf16, depth 2)
           + 2 * tm * D * 2        # out (bf16, depth 2)
           + D * D * 2             # W (bf16, Buffered(1))
           + 3 * D * 4             # b, gamma, beta (f32)
           + 6 * tm * D * 4)       # f32 intermediates / slack
    vmem_limit = int(min(max(2 * est, 32 * 1024 * 1024), 48 * 1024 * 1024))

    kernel = functools.partial(_postnorm_kernel, inv_d=1.0 / D)
    resident = pl.Buffered(buffer_count=1)  # grid-invariant: no double buffer

    out = pl.pallas_call(
        kernel,
        out_shape=jax.ShapeDtypeStruct((R, D), jnp.bfloat16),
        grid=grid,
        in_specs=[
            pl.BlockSpec((tm, D), lambda i: (i, 0)),                            # x: streamed row tiles
            pl.BlockSpec((D, D), lambda i: (0, 0), pipeline_mode=resident),     # W: VMEM-resident
            pl.BlockSpec((1, D), lambda i: (0, 0), pipeline_mode=resident),     # b
            pl.BlockSpec((1, D), lambda i: (0, 0), pipeline_mode=resident),     # gamma
            pl.BlockSpec((1, D), lambda i: (0, 0), pipeline_mode=resident),     # beta
        ],
        out_specs=pl.BlockSpec((tm, D), lambda i: (i, 0)),
        compiler_params=pltpu.CompilerParams(
            dimension_semantics=("parallel",),
            vmem_limit_bytes=vmem_limit),
    )(x2, w2, b2, g2, be2)

    return out.reshape(B, S, D)


def _reference(x, w, b, gamma, beta):
    # Same bf16 storage as the kernel path, f32 math.
    xf = x.astype(jnp.bfloat16).astype(jnp.float32)
    wf = w.astype(jnp.bfloat16).astype(jnp.float32)
    y = jnp.einsum("bsd,de->bse", xf, wf) + b.astype(jnp.float32)
    mean = jnp.mean(y, axis=-1, keepdims=True)
    var = jnp.mean((y - mean) ** 2, axis=-1, keepdims=True)
    y_hat = (y - mean) / jnp.sqrt(var + EPS)
    return y_hat * gamma.astype(jnp.float32) + beta.astype(jnp.float32)


if __name__ == "__main__":
    key = jax.random.PRNGKey(0)
    B, S, D = 2, 8, 128  # lane-dense hidden dim (D % 128 == 0)

    k_x, k_w = jax.random.split(key)
    x = jax.random.normal(k_x, (B, S, D), dtype=jnp.float32)

    # fn = Linear(D, D): xavier_uniform-style weight, zero bias (deterministic)
    limit = jnp.sqrt(6.0 / (D + D))
    w = jax.random.uniform(k_w, (D, D), minval=-limit, maxval=limit,
                           dtype=jnp.float32)  # laid out so y = x @ w
    b = jnp.zeros((D,), jnp.float32)

    # LayerNorm params: gamma=1, beta=0 (nn.LayerNorm default init)
    gamma = jnp.ones((D,), jnp.float32)
    beta = jnp.zeros((D,), jnp.float32)

    out = postnorm_linear(x, w, b, gamma, beta)
    jax.block_until_ready(out)

    ref = _reference(x, w, b, gamma, beta)
    assert out.shape == (B, S, D)
    assert jnp.allclose(out.astype(jnp.float32), ref, atol=3e-2, rtol=3e-2), \
        "mismatch vs reference"

    print("KERNEL_OK")
</pallas_src>

<mosaic_0001>
module attributes {stable_mosaic.version = 11 : i64} {
  func.func @_postnorm_kernel(%arg0: i32, %arg1: memref<16x128xbf16, #tpu.memory_space<vmem>>, %arg2: memref<128x128xbf16, #tpu.memory_space<vmem>>, %arg3: memref<1x128xf32, #tpu.memory_space<vmem>>, %arg4: memref<1x128xf32, #tpu.memory_space<vmem>>, %arg5: memref<1x128xf32, #tpu.memory_space<vmem>>, %arg6: memref<16x128xbf16, #tpu.memory_space<vmem>>) attributes {dimension_semantics = [#tpu.dimension_semantics<parallel>], iteration_bounds = array<i64: 1>, scalar_prefetch = 0 : i64, scratch_operands = 0 : i64, tpu.core_type = #tpu.core_type<tc>, window_params = [{transform_indices = @transform_0, window_bounds = array<i64: 16, 128>}, {pipeline_mode = #tpu.pipeline_mode<synchronous>, transform_indices = @transform_1, window_bounds = array<i64: 128, 128>}, {pipeline_mode = #tpu.pipeline_mode<synchronous>, transform_indices = @transform_2, window_bounds = array<i64: 1, 128>}, {pipeline_mode = #tpu.pipeline_mode<synchronous>, transform_indices = @transform_3, window_bounds = array<i64: 1, 128>}, {pipeline_mode = #tpu.pipeline_mode<synchronous>, transform_indices = @transform_4, window_bounds = array<i64: 1, 128>}, {transform_indices = @transform_5, window_bounds = array<i64: 16, 128>}]} {
    %c0 = arith.constant 0 : index
    %c0_0 = arith.constant 0 : index
    %0 = vector.load %arg1[%c0, %c0_0] : memref<16x128xbf16, #tpu.memory_space<vmem>>, vector<16x128xbf16>
    %c0_1 = arith.constant 0 : index
    %c0_2 = arith.constant 0 : index
    %1 = vector.load %arg2[%c0_1, %c0_2] : memref<128x128xbf16, #tpu.memory_space<vmem>>, vector<128x128xbf16>
    %cst = arith.constant dense<0.000000e+00> : vector<16x128xf32>
    %2 = tpu.matmul %0, %1, %cst {dimension_numbers = #tpu.dot_dimension_numbers<[1], [0], [0], [1], [0, 0, 1, 1], [], []>} : vector<16x128xbf16>, vector<128x128xbf16>, vector<16x128xf32> -> vector<16x128xf32>
    %c0_3 = arith.constant 0 : index
    %c0_4 = arith.constant 0 : index
    %3 = vector.load %arg3[%c0_3, %c0_4] : memref<1x128xf32, #tpu.memory_space<vmem>>, vector<1x128xf32>
    %4 = vector.broadcast %3 : vector<1x128xf32> to vector<16x128xf32>
    %5 = arith.addf %2, %4 : vector<16x128xf32>
    %cst_5 = arith.constant dense<0.000000e+00> : vector<16xf32>
    %6 = vector.multi_reduction <add>, %5, %cst_5 [1] : vector<16x128xf32> to vector<16xf32>
    %7 = vector.shape_cast %6 : vector<16xf32> to vector<16x1xf32>
    %8 = arith.mulf %5, %5 : vector<16x128xf32>
    %cst_6 = arith.constant dense<0.000000e+00> : vector<16xf32>
    %9 = vector.multi_reduction <add>, %8, %cst_6 [1] : vector<16x128xf32> to vector<16xf32>
    %10 = vector.shape_cast %9 : vector<16xf32> to vector<16x1xf32>
    %cst_7 = arith.constant 7.812500e-03 : f32
    %11 = vector.broadcast %cst_7 : f32 to vector<16x1xf32>
    %12 = arith.mulf %7, %11 : vector<16x1xf32>
    %cst_8 = arith.constant 7.812500e-03 : f32
    %13 = vector.broadcast %cst_8 : f32 to vector<16x1xf32>
    %14 = arith.mulf %10, %13 : vector<16x1xf32>
    %15 = arith.mulf %12, %12 : vector<16x1xf32>
    %16 = arith.subf %14, %15 : vector<16x1xf32>
    %cst_9 = arith.constant 0.000000e+00 : f32
    %17 = vector.broadcast %cst_9 : f32 to vector<16x1xf32>
    %18 = arith.maximumf %16, %17 : vector<16x1xf32>
    %19 = vector.broadcast %12 : vector<16x1xf32> to vector<16x128xf32>
    %20 = arith.subf %5, %19 : vector<16x128xf32>
    %cst_10 = arith.constant 9.99999974E-6 : f32
    %21 = vector.broadcast %cst_10 : f32 to vector<16x1xf32>
    %22 = arith.addf %18, %21 : vector<16x1xf32>
    %23 = math.rsqrt %22 : vector<16x1xf32>
    %24 = vector.broadcast %23 : vector<16x1xf32> to vector<16x128xf32>
    %25 = arith.mulf %20, %24 : vector<16x128xf32>
    %c0_11 = arith.constant 0 : index
    %c0_12 = arith.constant 0 : index
    %26 = vector.load %arg4[%c0_11, %c0_12] : memref<1x128xf32, #tpu.memory_space<vmem>>, vector<1x128xf32>
    %27 = vector.broadcast %26 : vector<1x128xf32> to vector<16x128xf32>
    %28 = arith.mulf %25, %27 : vector<16x128xf32>
    %c0_13 = arith.constant 0 : index
    %c0_14 = arith.constant 0 : index
    %29 = vector.load %arg5[%c0_13, %c0_14] : memref<1x128xf32, #tpu.memory_space<vmem>>, vector<1x128xf32>
    %30 = vector.broadcast %29 : vector<1x128xf32> to vector<16x128xf32>
    %31 = arith.addf %28, %30 : vector<16x128xf32>
    %32 = arith.truncf %31 : vector<16x128xf32> to vector<16x128xbf16>
    %c0_15 = arith.constant 0 : index
    %c0_16 = arith.constant 0 : index
    %33 = vector.load %arg6[%c0_15, %c0_16] : memref<16x128xbf16, #tpu.memory_space<vmem>>, vector<16x128xbf16>
    tpu.vector_store %arg6[%c0_15, %c0_16], %32 {strides = array<i32>} : memref<16x128xbf16, #tpu.memory_space<vmem>>, vector<16x128xbf16>,
    return
  }
  func.func @transform_0(%arg0: i32) -> (i32, i32) {
    %c0_i32 = arith.constant 0 : i32
    %c0_i32_0 = arith.constant 0 : i32
    return %arg0, %c0_i32 : i32, i32
  }
  func.func @transform_1(%arg0: i32) -> (i32, i32) {
    %c0_i32 = arith.constant 0 : i32
    %c0_i32_0 = arith.constant 0 : i32
    %c0_i32_1 = arith.constant 0 : i32
    return %c0_i32, %c0_i32_0 : i32, i32
  }
  func.func @transform_2(%arg0: i32) -> (i32, i32) {
    %c0_i32 = arith.constant 0 : i32
    %c0_i32_0 = arith.constant 0 : i32
    %c0_i32_1 = arith.constant 0 : i32
    return %c0_i32, %c0_i32_0 : i32, i32
  }
  func.func @transform_3(%arg0: i32) -> (i32, i32) {
    %c0_i32 = arith.constant 0 : i32
    %c0_i32_0 = arith.constant 0 : i32
    %c0_i32_1 = arith.constant 0 : i32
    return %c0_i32, %c0_i32_0 : i32, i32
  }
  func.func @transform_4(%arg0: i32) -> (i32, i32) {
    %c0_i32 = arith.constant 0 : i32
    %c0_i32_0 = arith.constant 0 : i32
    %c0_i32_1 = arith.constant 0 : i32
    return %c0_i32, %c0_i32_0 : i32, i32
  }
  func.func @transform_5(%arg0: i32) -> (i32, i32) {
    %c0_i32 = arith.constant 0 : i32
    %c0_i32_0 = arith.constant 0 : i32
    return %arg0, %c0_i32 : i32, i32
  }
}

</mosaic_0001>

<llo_original>
// kernel: tpu_custom_call.1
$region0: #{tpu_custom_call.1}
  #allocation0 [shape = 'u32[]', space=smem, size = 0x4, offset = 0x4, fixed_abs, tag = 'smem constant byte address 0x4 - core index']
  #allocation1 [shape = 'u32[144,128]{1,0:T(1,128)}', space=vmem, size = 0x12000, scoped, tag = 'internal scratch']
  %s0 = inlined_call_operand.hbm [shape: bf16[16,128], index: 0, kind: input, shape index: {}]
  %s1 = inlined_call_operand.hbm [shape: bf16[128,128], index: 1, kind: input, shape index: {}]
  %s2 = inlined_call_operand.vmem [shape: f32[1,128], index: 2, kind: input, shape index: {}]
  %s3 = inlined_call_operand.vmem [shape: f32[1,128], index: 3, kind: input, shape index: {}]
  %s4 = inlined_call_operand.vmem [shape: f32[1,128], index: 4, kind: input, shape index: {}]
  %s5 = inlined_call_operand.hbm [shape: bf16[16,128], index: 5, kind: output, shape index: {}]
  %s6 = sld [smem:[#allocation0]]
  $region38: #{tpu_custom_call.1} parent=0
    _
  %s8 = ssub.s32 1, %s6
  %s9 = scalar_select 0, %s8, %s6
  $region1: #{tpu_custom_call.1} parent=0
    #allocation2 [shape = 'u8[4096]{0}', space=vmem, size = 0x1000, scoped, tag = 'input window, operand 0, single buffered']
    #allocation3 [shape = 's32[1]{0}', space=sflag, size = 0x4, scoped, tag = 'scoped memory for tpu_custom_call.1']
    #allocation4 [shape = 's32[1]{0}', space=sflag, size = 0x4, scoped, tag = 'scoped memory for tpu_custom_call.1']
    #allocation5 [shape = 'u8[32768]{0}', space=vmem, size = 0x8000, scoped, tag = 'input window, operand 1, single buffered']
    #allocation6 [shape = 's32[1]{0}', space=sflag, size = 0x4, scoped, tag = 'scoped memory for tpu_custom_call.1']
    #allocation7 [shape = 'u8[4096]{0}', space=vmem, size = 0x1000, scoped, tag = 'output window, operand 0, single buffered']
    %10 = vsyncpa [#allocation3], 0
    %11 = vsyncpa [#allocation6], 0
    %12 = vsyncpa [#allocation4], 0
    // Predicated region
    $region2: #{tpu_custom_call.1} parent=1 // pred_check
      _
    $region3: #{tpu_custom_call.1} parent=1 // pred_check_branch
      %14 = sbr.rel (0) target = $region5
    $region4: #{tpu_custom_call.1} parent=1 // pred_region
      %s16 = ssub.s32 128, 128
      %17 = vsyncadd [#allocation3], %s16
      %s18 = sshll.u32 [#allocation2], 4
      %s19 = int_to_ptr.vmem [resolvable:$true] %s18
      %24 = dma.hbm_to_vmem [thread:$0]  %s0, 128, %s19, [#allocation3], 64, 64, 4
    $region5: #{tpu_custom_call.1} parent=1 // pred_fallthru
      _
    // Predicated region
    $region6: #{tpu_custom_call.1} parent=1 // pred_check
      _
    $region7: #{tpu_custom_call.1} parent=1 // pred_check_branch
      %26 = sbr.rel (0) target = $region9
    $region8: #{tpu_custom_call.1} parent=1 // pred_region
      %s28 = ssub.s32 1024, 1024
      %29 = vsyncadd [#allocation6], %s28
      %s30 = sshll.u32 [#allocation5], 4
      %s31 = int_to_ptr.vmem [resolvable:$true] %s30
      %36 = dma.hbm_to_vmem [thread:$0]  %s1, 1024, %s31, [#allocation6], 64, 64, 4
    $region9: #{tpu_custom_call.1} parent=1 // pred_fallthru
      _
    // Predicated region
    $region10: #{tpu_custom_call.1} parent=1 // pred_check
      _
    $region11: #{tpu_custom_call.1} parent=1 // pred_check_branch
      %38 = sbr.rel (0) target = $region13
    $region12: #{tpu_custom_call.1} parent=1 // pred_region
      _
    $region13: #{tpu_custom_call.1} parent=1 // pred_fallthru
      _
    // Predicated region
    $region14: #{tpu_custom_call.1} parent=1 // pred_check
      _
    $region15: #{tpu_custom_call.1} parent=1 // pred_check_branch
      %40 = sbr.rel (0) target = $region17
    $region16: #{tpu_custom_call.1} parent=1 // pred_region
      _
    $region17: #{tpu_custom_call.1} parent=1 // pred_fallthru
      _
    // Predicated region
    $region18: #{tpu_custom_call.1} parent=1 // pred_check
      _
    $region19: #{tpu_custom_call.1} parent=1 // pred_check_branch
      %42 = sbr.rel (0) target = $region21
    $region20: #{tpu_custom_call.1} parent=1 // pred_region
      _
    $region21: #{tpu_custom_call.1} parent=1 // pred_fallthru
      _
    // Predicated region
    $region22: #{tpu_custom_call.1} parent=1 // pred_check
      _
    $region23: #{tpu_custom_call.1} parent=1 // pred_check_branch
      %44 = sbr.rel (0) target = $region25
    $region24: #{tpu_custom_call.1} parent=1 // pred_region
      %45 = dma.done [#allocation3], 128
    $region25: #{tpu_custom_call.1} parent=1 // pred_fallthru
      _
    // Predicated region
    $region26: #{tpu_custom_call.1} parent=1 // pred_check
      _
    $region27: #{tpu_custom_call.1} parent=1 // pred_check_branch
      %47 = sbr.rel (0) target = $region29
    $region28: #{tpu_custom_call.1} parent=1 // pred_region
      %48 = dma.done [#allocation6], 1024
    $region29: #{tpu_custom_call.1} parent=1 // pred_fallthru
      _
    %v50 = vld [vmem:[#allocation2] sm:$0xf]
    %v51 = vld [vmem:[#allocation2 + $0x4] sm:$0xf]
    %v52 = vld [vmem:[#allocation5] sm:$0xf]
    %v53 = vld [vmem:[#allocation5 + $0x4] sm:$0xf]
    %v54 = vld [vmem:[#allocation5 + $0x8] sm:$0xf]
    %v55 = vld [vmem:[#allocation5 + $0xc] sm:$0xf]
    %v56 = vld [vmem:[#allocation5 + $0x10] sm:$0xf]
    %v57 = vld [vmem:[#allocation5 + $0x14] sm:$0xf]
    %v58 = vld [vmem:[#allocation5 + $0x18] sm:$0xf]
    %v59 = vld [vmem:[#allocation5 + $0x1c] sm:$0xf]
    %v60 = vld [vmem:[#allocation5 + $0x20] sm:$0xf]
    %v61 = vld [vmem:[#allocation5 + $0x24] sm:$0xf]
    %v62 = vld [vmem:[#allocation5 + $0x28] sm:$0xf]
    %v63 = vld [vmem:[#allocation5 + $0x2c] sm:$0xf]
    %v64 = vld [vmem:[#allocation5 + $0x30] sm:$0xf]
    %v65 = vld [vmem:[#allocation5 + $0x34] sm:$0xf]
    %v66 = vld [vmem:[#allocation5 + $0x38] sm:$0xf]
    %v67 = vld [vmem:[#allocation5 + $0x3c] sm:$0xf]
    %v68 = vld [vmem:[%s2] sm:$0x1]
    %v70 = vlaneseq
    %v71 = vshrl.u32 %v70, 7
    %v72 = vsub.s32 0, %v71
    %v73 = vrot.slane %v68, %v72
    %v77 = vunpack.c.l.b16 %v50
    %v78 = vunpack.c.l.b16 %v51
    %v79 = vpack.c.b16 %v78, %v77
    %v97 = vunpack.c.l.b16 %v52
    %v98 = vunpack.c.l.b16 %v53
    %v99 = vunpack.c.l.b16 %v54
    %v100 = vunpack.c.l.b16 %v55
    %v101 = vunpack.c.l.b16 %v56
    %v102 = vunpack.c.l.b16 %v57
    %v103 = vunpack.c.l.b16 %v58
    %v104 = vunpack.c.l.b16 %v59
    %v105 = vunpack.c.l.b16 %v60
    %v106 = vunpack.c.l.b16 %v61
    %v107 = vunpack.c.l.b16 %v62
    %v108 = vunpack.c.l.b16 %v63
    %v109 = vunpack.c.l.b16 %v64
    %v110 = vunpack.c.l.b16 %v65
    %v111 = vunpack.c.l.b16 %v66
    %v112 = vunpack.c.l.b16 %v67
    %v113 = vpack.c.b16 %v98, %v97
    %v114 = vpack.c.b16 %v100, %v99
    %v115 = vpack.c.b16 %v102, %v101
    %v116 = vpack.c.b16 %v104, %v103
    %v117 = vpack.c.b16 %v106, %v105
    %v118 = vpack.c.b16 %v108, %v107
    %v119 = vpack.c.b16 %v110, %v109
    %v120 = vpack.c.b16 %v112, %v111
    %129 = vmatprep.subr.bf16.mxu0 0
    %130 = vmatpush1.bf16.msra.mxu0 %v120
    %131 = vmatprep.subr.bf16.mxu0 0
    %132 = vmatpush1.bf16.msra.mxu0 %v119
    %133 = vmatprep.subr.bf16.mxu0 0
    %134 = vmatpush1.bf16.msra.mxu0 %v118
    %135 = vmatprep.subr.bf16.mxu0 0
    %136 = vmatpush1.bf16.msra.mxu0 %v117
    %137 = vmatprep.subr.bf16.mxu0 0
    %138 = vmatpush1.bf16.msra.mxu0 %v116
    %139 = vmatprep.subr.bf16.mxu0 0
    %140 = vmatpush1.bf16.msra.mxu0 %v115
    %141 = vmatprep.subr.bf16.mxu0 0
    %142 = vmatpush1.bf16.msra.mxu0 %v114
    %143 = vmatprep.subr.bf16.mxu0 0
    %144 = vmatpush1.bf16.msra.mxu0 %v113
    %145 = vmatprep.subr.bf16.mxu0 0
    %146 = vmatpush2.bf16.msra.mxu0 0
    %147 = vmatprep.subr.bf16.mxu0 0
    %148 = vmatpush2.bf16.msra.mxu0 0
    %149 = vmatprep.subr.bf16.mxu0 0
    %150 = vmatpush2.bf16.msra.mxu0 0
    %151 = vmatprep.subr.bf16.mxu0 0
    %152 = vmatpush2.bf16.msra.mxu0 0
    %153 = vmatprep.subr.bf16.mxu0 0
    %154 = vmatpush2.bf16.msra.mxu0 0
    %155 = vmatprep.subr.bf16.mxu0 0
    %156 = vmatpush2.bf16.msra.mxu0 0
    %157 = vmatprep.subr.bf16.mxu0 0
    %158 = vmatpush2.bf16.msra.mxu0 0
    %159 = vmatprep.subr.bf16.mxu0 0
    %160 = vmatpush2.bf16.msra.mxu0 0
    %161 = vmatprep.mubr.bf16.mxu0 0
    %162 = vmatmul.mubr.bf16.gmra.mxu0 %v79
    %v163 = vpop.f32.mrf.mxu0
    %v164 = vadd.f32 %v73, %v163
    %v165 = vpop.f32.mrf.mxu0
    %v166 = vpop.f32.mrf.mxu0
    %v167 = vadd.f32 %v73, %v166
    %v168 = vpop.f32.mrf.mxu0
    %169 = vdwg.mxu0
    %170 = vadd.xlane.f32.xlu0 %v164
    %v171 = vpop.xlane.xlu0 %170
    %172 = vadd.xlane.f32.xlu0 %v167
    %v173 = vpop.xlane.xlu0 %172
    %v174 = vmul.f32 %v164, %v164
    %v175 = vmul.f32 %v167, %v167
    %176 = vadd.xlane.f32.xlu0 %v174
    %v177 = vpop.xlane.xlu0 %176
    %178 = vadd.xlane.f32.xlu0 %v175
    %v179 = vpop.xlane.xlu0 %178
    %v180 = vmul.f32 %v171, 0.0078125
    %v181 = vmul.f32 %v173, 0.0078125
    %v182 = vmul.f32 %v177, 0.0078125
    %v183 = vmul.f32 %v179, 0.0078125
    %v184 = vmul.f32 %v180, %v180
    %v185 = vmul.f32 %v181, %v181
    %v186 = vsub.f32 %v182, %v184
    %v187 = vsub.f32 %v183, %v185
    %v188 = vmax.f32 %v186, 0.0
    %v189 = vmax.f32 %v187, 0.0
    %v190 = vsub.f32 %v164, %v180
    %v191 = vsub.f32 %v167, %v181
    %v192 = vadd.f32 %v188, 1e-05
    %v193 = vadd.f32 %v189, 1e-05
    %v194 = vrsqrt.pop %v192
    %v195 = vrsqrt.pop %v193
    %v196 = vmul.f32 %v190, %v194
    %v197 = vmul.f32 %v191, %v195
    %v198 = vld [vmem:[%s3] sm:$0x1]
    %v200 = vlaneseq
    %v201 = vshrl.u32 %v200, 7
    %v202 = vsub.s32 0, %v201
    %v203 = vrot.slane %v198, %v202
    %v205 = vmul.f32 %v196, %v203
    %v206 = vmul.f32 %v197, %v203
    %v207 = vld [vmem:[%s4] sm:$0x1]
    %v209 = vlaneseq
    %v210 = vshrl.u32 %v209, 7
    %v211 = vsub.s32 0, %v210
    %v212 = vrot.slane %v207, %v211
    %v214 = vadd.f32 %v205, %v212
    %v215 = vadd.f32 %v206, %v212
    %v216 = vpack.c.bf16 %v215, %v214
    %v218 = vunpack.c.l.b16 %v216
    %v219 = vunpack.c.h.b16 %v216
    %v220 = vpack.c.b16 %v218, %v218
    %v221 = vpack.c.b16 %v219, %v219
    %224 = vst [vmem:[#allocation7] sm:$0xf] %v220
    %225 = vst [vmem:[#allocation7 + $0x4] sm:$0xf] %v221
    // Predicated region
    $region30: #{tpu_custom_call.1} parent=1 // pred_check
      _
    $region31: #{tpu_custom_call.1} parent=1 // pred_check_branch
      %227 = sbr.rel (0) target = $region33
    $region32: #{tpu_custom_call.1} parent=1 // pred_region
      %s229 = ssub.s32 128, 128
      %230 = vsyncadd [#allocation4], %s229
      %s231 = sshll.u32 [#allocation7], 4
      %s232 = int_to_ptr.vmem [resolvable:$true] %s231
      %237 = dma.vmem_to_hbm [thread:$0]  %s232, 128, %s5, [#allocation4], 64, 64, 4
    $region33: #{tpu_custom_call.1} parent=1 // pred_fallthru
      _
    // Predicated region
    $region34: #{tpu_custom_call.1} parent=1 // pred_check
      _
    $region35: #{tpu_custom_call.1} parent=1 // pred_check_branch
      %239 = sbr.rel (0) target = $region37
    $region36: #{tpu_custom_call.1} parent=1 // pred_region
      %240 = dma.done [#allocation4], 128
    $region37: #{tpu_custom_call.1} parent=1 // pred_fallthru
      _
    %241 = vsyncpa [#allocation3], 1
    %242 = vsyncpa [#allocation6], 1
    %243 = vsyncpa [#allocation4], 1

</llo_original>
